<compile_context>
chip_gen: v5e
topology: v5e:2x2
jax: 0.10.0
libtpu: 0.0.40
codegen_flags: <defaults>
</compile_context>

<pallas_src>
import functools
import math

import jax
import jax.numpy as jnp
from jax.experimental import pallas as pl
from jax.experimental.pallas import tpu as pltpu


# ----------------------------------------------------------------------------
# small helpers
# ----------------------------------------------------------------------------
def _round_up(x, m):
    return ((x + m - 1) // m) * m


def _pad_rows(x, p_pad):
    p = x.shape[0]
    if p_pad == p:
        return x
    return jnp.pad(x, ((0, p_pad - p), (0, 0)))


def _row_tiling(p, max_tile=512):
    tile = min(max_tile, _round_up(p, 8))
    return _round_up(p, tile), tile


# ----------------------------------------------------------------------------
# Pallas kernels
# ----------------------------------------------------------------------------
def _conv1x1_kernel(x_ref, w_ref, b_ref, o_ref, *, relu):
    # x: (TP, Cin) f32, w: (Cin, Cout) bf16, b: (1, Cout) f32
    y = jnp.dot(x_ref[...].astype(jnp.bfloat16), w_ref[...],
                preferred_element_type=jnp.float32) + b_ref[...]
    if relu:
        y = jnp.maximum(y, 0.0)
    o_ref[...] = y


def _query_embed_kernel(x_ref, w0_ref, b0_ref, w1_ref, b1_ref, o_ref):
    # fused query_embedding: Conv(3C/2 -> C) + ReLU + Conv(C -> C)
    y = jnp.dot(x_ref[...].astype(jnp.bfloat16), w0_ref[...],
                preferred_element_type=jnp.float32) + b0_ref[...]
    y = jnp.maximum(y, 0.0)
    o_ref[...] = jnp.dot(y.astype(jnp.bfloat16), w1_ref[...],
                         preferred_element_type=jnp.float32) + b1_ref[...]


def _head_branches_kernel(x_ref,
                          cls_w_ref, cls_b_ref, cls_g_ref, cls_bt_ref,
                          cls_ow_ref, cls_ob_ref,
                          reg_w_ref, reg_b_ref, reg_ow_ref, reg_ob_ref,
                          cls_o_ref, reg_o_ref, *, n_cls, n_reg):
    # one fused kernel for both cls and reg branches (all weights resident).
    x = x_ref[...]                                              # (TP, C) f32

    # --- classification branch: n_cls x (conv + LayerNorm(channel) + ReLU) ---
    c = x
    for i in range(n_cls):
        y = jnp.dot(c.astype(jnp.bfloat16), cls_w_ref[i],
                    preferred_element_type=jnp.float32) + cls_b_ref[i]
        mean = jnp.mean(y, axis=-1, keepdims=True)
        var = jnp.mean((y - mean) ** 2, axis=-1, keepdims=True)
        y = (y - mean) * jax.lax.rsqrt(var + 1e-5)
        y = y * cls_g_ref[i] + cls_bt_ref[i]
        c = jnp.maximum(y, 0.0)
    cls_o_ref[...] = jnp.dot(c.astype(jnp.bfloat16), cls_ow_ref[...],
                             preferred_element_type=jnp.float32) + cls_ob_ref[...]

    # --- regression branch: n_reg x (conv + ReLU) ---------------------------
    g = x
    for i in range(n_reg):
        y = jnp.dot(g.astype(jnp.bfloat16), reg_w_ref[i],
                    preferred_element_type=jnp.float32) + reg_b_ref[i]
        g = jnp.maximum(y, 0.0)
    reg_o_ref[...] = jnp.dot(g.astype(jnp.bfloat16), reg_ow_ref[...],
                             preferred_element_type=jnp.float32) + reg_ob_ref[...]


def _flash_xattn_kernel(q_ref, f_ref, p_ref, wq_ref, wk_ref, wv_ref, wo_ref,
                        o_ref, qproj, m_sc, l_sc, acc,
                        *, scale, nk_valid, kv_tile):
    # PETR-style cross-attention decoder layer (transformer stub), flash-style
    # online softmax over KV blocks.  grid = (bs, n_kv_blocks).
    kb = pl.program_id(1)

    @pl.when(kb == 0)
    def _():
        # Q projection (scale folded in), computed once per batch element.
        qproj[...] = jnp.dot(q_ref[...].astype(jnp.bfloat16), wq_ref[...],
                             preferred_element_type=jnp.float32) * scale
        m_sc[...] = jnp.full(m_sc.shape, -jnp.inf, m_sc.dtype)
        l_sc[...] = jnp.zeros(l_sc.shape, l_sc.dtype)
        acc[...] = jnp.zeros(acc.shape, acc.dtype)

    feat = f_ref[0]                                      # (kv_tile, C)
    pos = p_ref[0]
    k = jnp.dot((feat + pos).astype(jnp.bfloat16), wk_ref[...],
                preferred_element_type=jnp.float32)
    v = jnp.dot(feat.astype(jnp.bfloat16), wv_ref[...],
                preferred_element_type=jnp.float32)

    s = jax.lax.dot_general(qproj[...].astype(jnp.bfloat16),
                            k.astype(jnp.bfloat16),
                            (((1,), (1,)), ((), ())),
                            preferred_element_type=jnp.float32)  # (Nq, kv_tile)
    if nk_valid % kv_tile != 0:
        key_idx = kb * kv_tile + jax.lax.broadcasted_iota(jnp.int32, s.shape, 1)
        s = jnp.where(key_idx < nk_valid, s, -jnp.inf)

    m_new = jnp.maximum(m_sc[...], jnp.max(s, axis=-1, keepdims=True))
    alpha = jnp.exp(m_sc[...] - m_new)
    p_mat = jnp.exp(s - m_new)
    l_sc[...] = alpha * l_sc[...] + jnp.sum(p_mat, axis=-1, keepdims=True)
    acc[...] = alpha * acc[...] + jnp.dot(p_mat.astype(jnp.bfloat16),
                                          v.astype(jnp.bfloat16),
                                          preferred_element_type=jnp.float32)
    m_sc[...] = m_new

    @pl.when(kb == pl.num_programs(1) - 1)
    def _():
        ctx = acc[...] * pl.reciprocal(l_sc[...], approx=True)
        out = q_ref[...] + jnp.dot(ctx.astype(jnp.bfloat16), wo_ref[...],
                                   preferred_element_type=jnp.float32)
        o_ref[0] = out


# ----------------------------------------------------------------------------
# Pallas wrappers
# ----------------------------------------------------------------------------
def conv1x1(x, w, b, *, relu=False, max_tile=512):
    p, cin = x.shape
    cout = w.shape[1]
    p_pad, tile = _row_tiling(p, max_tile)
    xp = _pad_rows(x, p_pad)
    out = pl.pallas_call(
        functools.partial(_conv1x1_kernel, relu=relu),
        out_shape=jax.ShapeDtypeStruct((p_pad, cout), jnp.float32),
        grid=(p_pad // tile,),
        in_specs=[
            pl.BlockSpec((tile, cin), lambda i: (i, 0)),
            pl.BlockSpec((cin, cout), lambda i: (0, 0)),
            pl.BlockSpec((1, cout), lambda i: (0, 0)),
        ],
        out_specs=pl.BlockSpec((tile, cout), lambda i: (i, 0)),
        compiler_params=pltpu.CompilerParams(dimension_semantics=("parallel",)),
    )(xp, w, b)
    return out[:p]


def query_embedding(qe, w0, b0, w1, b1):
    nq, cin = qe.shape
    chid, cout = w0.shape[1], w1.shape[1]
    nq_pad = _round_up(nq, 8)
    xp = _pad_rows(qe, nq_pad)
    out = pl.pallas_call(
        _query_embed_kernel,
        out_shape=jax.ShapeDtypeStruct((nq_pad, cout), jnp.float32),
        grid=(1,),
        in_specs=[
            pl.BlockSpec((nq_pad, cin), lambda i: (0, 0)),
            pl.BlockSpec((cin, chid), lambda i: (0, 0)),
            pl.BlockSpec((1, chid), lambda i: (0, 0)),
            pl.BlockSpec((chid, cout), lambda i: (0, 0)),
            pl.BlockSpec((1, cout), lambda i: (0, 0)),
        ],
        out_specs=pl.BlockSpec((nq_pad, cout), lambda i: (0, 0)),
    )(xp, w0, b0, w1, b1)
    return out[:nq]


def head_branches(x, params, *, n_cls, n_reg, max_tile=512):
    p, c = x.shape
    cout_cls = params["cls_ow"].shape[1]
    cout_reg = params["reg_ow"].shape[1]
    p_pad, tile = _row_tiling(p, max_tile)
    xp = _pad_rows(x, p_pad)
    cls_rows, reg_rows = pl.pallas_call(
        functools.partial(_head_branches_kernel, n_cls=n_cls, n_reg=n_reg),
        out_shape=(jax.ShapeDtypeStruct((p_pad, cout_cls), jnp.float32),
                   jax.ShapeDtypeStruct((p_pad, cout_reg), jnp.float32)),
        grid=(p_pad // tile,),
        in_specs=[
            pl.BlockSpec((tile, c), lambda i: (i, 0)),
            pl.BlockSpec((n_cls, c, c), lambda i: (0, 0, 0)),
            pl.BlockSpec((n_cls, c), lambda i: (0, 0)),
            pl.BlockSpec((n_cls, c), lambda i: (0, 0)),
            pl.BlockSpec((n_cls, c), lambda i: (0, 0)),
            pl.BlockSpec((c, cout_cls), lambda i: (0, 0)),
            pl.BlockSpec((1, cout_cls), lambda i: (0, 0)),
            pl.BlockSpec((n_reg, c, c), lambda i: (0, 0, 0)),
            pl.BlockSpec((n_reg, c), lambda i: (0, 0)),
            pl.BlockSpec((c, cout_reg), lambda i: (0, 0)),
            pl.BlockSpec((1, cout_reg), lambda i: (0, 0)),
        ],
        out_specs=(pl.BlockSpec((tile, cout_cls), lambda i: (i, 0)),
                   pl.BlockSpec((tile, cout_reg), lambda i: (i, 0))),
        compiler_params=pltpu.CompilerParams(dimension_semantics=("parallel",)),
    )(xp,
      params["cls_w"], params["cls_b"], params["cls_g"], params["cls_beta"],
      params["cls_ow"], params["cls_ob"],
      params["reg_w"], params["reg_b"], params["reg_ow"], params["reg_ob"])
    return cls_rows[:p], reg_rows[:p]


def cross_attention(q, feat_kv, pos_kv, wq, wk, wv, wo, *, kv_tile=512):
    nq, c = q.shape
    bs, nk, _ = feat_kv.shape
    kv_tile = min(kv_tile, _round_up(nk, 8))
    nk_pad = _round_up(nk, kv_tile)
    nq_pad = _round_up(nq, 8)
    qp = _pad_rows(q, nq_pad)
    if nk_pad != nk:
        pad = ((0, 0), (0, nk_pad - nk), (0, 0))
        feat_kv = jnp.pad(feat_kv, pad)
        pos_kv = jnp.pad(pos_kv, pad)
    out = pl.pallas_call(
        functools.partial(_flash_xattn_kernel, scale=1.0 / math.sqrt(c),
                          nk_valid=nk, kv_tile=kv_tile),
        out_shape=jax.ShapeDtypeStruct((bs, nq_pad, c), jnp.float32),
        grid=(bs, nk_pad // kv_tile),
        in_specs=[
            pl.BlockSpec((nq_pad, c), lambda b, kb: (0, 0)),
            pl.BlockSpec((1, kv_tile, c), lambda b, kb: (b, kb, 0)),
            pl.BlockSpec((1, kv_tile, c), lambda b, kb: (b, kb, 0)),
            pl.BlockSpec((c, c), lambda b, kb: (0, 0)),
            pl.BlockSpec((c, c), lambda b, kb: (0, 0)),
            pl.BlockSpec((c, c), lambda b, kb: (0, 0)),
            pl.BlockSpec((c, c), lambda b, kb: (0, 0)),
        ],
        out_specs=pl.BlockSpec((1, nq_pad, c), lambda b, kb: (b, 0, 0)),
        scratch_shapes=[
            pltpu.VMEM((nq_pad, c), jnp.float32),   # q projection
            pltpu.VMEM((nq_pad, 1), jnp.float32),   # running max
            pltpu.VMEM((nq_pad, 1), jnp.float32),   # running denom
            pltpu.VMEM((nq_pad, c), jnp.float32),   # accumulator
        ],
        compiler_params=pltpu.CompilerParams(
            dimension_semantics=("parallel", "arbitrary")),
    )(qp, feat_kv, pos_kv, wq, wk, wv, wo)
    return out[:, :nq]


# ----------------------------------------------------------------------------
# Glue (plain JAX): positional-embedding math, inverse sigmoid
# ----------------------------------------------------------------------------
def inverse_sigmoid(x, eps=1e-5):
    x = jnp.clip(x, 0.0, 1.0)
    x1 = jnp.maximum(x, eps)
    x2 = jnp.maximum(1.0 - x, eps)
    return jnp.log(x1 / x2)


def pos2posemb3d(pos, num_pos_feats=128, temperature=10000):
    scale = 2.0 * math.pi
    pos = pos * scale
    dim_t = jnp.arange(num_pos_feats, dtype=jnp.float32)
    dim_t = temperature ** (2.0 * jnp.floor(dim_t / 2.0) / num_pos_feats)

    def embed(p):
        p = p[..., None] / dim_t
        emb = jnp.stack((jnp.sin(p[..., 0::2]), jnp.cos(p[..., 1::2])), axis=-1)
        return emb.reshape(*p.shape[:-1], -1)

    pos_x = embed(pos[..., 0])
    pos_y = embed(pos[..., 1])
    pos_z = embed(pos[..., 2])
    return jnp.concatenate((pos_y, pos_x, pos_z), axis=-1)


# ----------------------------------------------------------------------------
# Parameter init (deterministic, synthetic); matmul weights stored in bf16
# ----------------------------------------------------------------------------
def init_params(key, *, in_channels, embed_dims, num_query, cls_out, reg_out,
                num_cls_fcs, num_reg_fcs):
    c = embed_dims
    keys = jax.random.split(key, 12)

    def w_init(k, cin, cout, std=0.02):
        return jax.random.normal(k, (cin, cout), jnp.float32) * std

    p = {}
    # input_project
    p["ip_w"] = w_init(keys[0], in_channels, c).astype(jnp.bfloat16)
    p["ip_b"] = jnp.zeros((1, c), jnp.float32)
    # query_embedding: Conv(3C/2 -> C) + ReLU + Conv(C -> C)
    p["qe0_w"] = w_init(keys[1], c * 3 // 2, c).astype(jnp.bfloat16)
    p["qe0_b"] = jnp.zeros((1, c), jnp.float32)
    p["qe1_w"] = w_init(keys[2], c, c).astype(jnp.bfloat16)
    p["qe1_b"] = jnp.zeros((1, c), jnp.float32)
    # cls branch (stacked weights, output channels padded to 128 lanes)
    kcls = jax.random.split(keys[3], num_cls_fcs)
    p["cls_w"] = jnp.stack([w_init(kcls[i], c, c)
                            for i in range(num_cls_fcs)]).astype(jnp.bfloat16)
    p["cls_b"] = jnp.zeros((num_cls_fcs, c), jnp.float32)
    p["cls_g"] = jnp.ones((num_cls_fcs, c), jnp.float32)
    p["cls_beta"] = jnp.zeros((num_cls_fcs, c), jnp.float32)
    cls_out_pad = _round_up(cls_out, 128)
    bias_cls = -math.log((1.0 - 0.01) / 0.01)       # bias_init_with_prob(0.01)
    w = w_init(keys[4], c, cls_out, std=0.01)
    p["cls_ow"] = jnp.pad(w, ((0, 0), (0, cls_out_pad - cls_out))).astype(jnp.bfloat16)
    b = jnp.full((cls_out,), bias_cls, jnp.float32)
    p["cls_ob"] = jnp.pad(b, (0, cls_out_pad - cls_out)).reshape(1, cls_out_pad)
    # reg branch
    kreg = jax.random.split(keys[5], num_reg_fcs)
    p["reg_w"] = jnp.stack([w_init(kreg[i], c, c)
                            for i in range(num_reg_fcs)]).astype(jnp.bfloat16)
    p["reg_b"] = jnp.zeros((num_reg_fcs, c), jnp.float32)
    reg_out_pad = _round_up(reg_out, 128)
    w = w_init(keys[6], c, reg_out)
    p["reg_ow"] = jnp.pad(w, ((0, 0), (0, reg_out_pad - reg_out))).astype(jnp.bfloat16)
    p["reg_ob"] = jnp.zeros((1, reg_out_pad), jnp.float32)
    # reference points (nn.init.uniform_(.., 0, 1))
    p["reference_points"] = jax.random.uniform(keys[7], (num_query, 3),
                                               jnp.float32, 0.0, 1.0)
    # transformer stub (single cross-attention layer)
    katt = jax.random.split(keys[8], 4)
    for name, k in zip(("wq", "wk", "wv", "wo"), katt):
        p[f"attn_{name}"] = (jax.random.normal(k, (c, c), jnp.float32)
                             * 0.05).astype(jnp.bfloat16)
    return p


# ----------------------------------------------------------------------------
# PETRHead forward (compile_model=True path: pos_embed supplied via meta)
# ----------------------------------------------------------------------------
def petr_head_forward(params, feat, pos_embed, *, num_views, embed_dims,
                      num_query_h, num_query_w, num_cls_fcs, num_reg_fcs,
                      cls_out, reg_out, kv_tile=512):
    n, cin, h, w = feat.shape
    bs = n // num_views
    hq, wq = num_query_h, num_query_w
    nq = hq * wq
    nk = num_views * h * w

    # ---- input_project (1x1 conv), token layout throughout ----------------
    x_rows = feat.transpose(0, 2, 3, 1).reshape(n * h * w, cin)
    feat_rows = conv1x1(x_rows, params["ip_w"], params["ip_b"])   # (n*h*w, C)
    # token order (b, view, h, w) == reference's multi-view concat ordering
    kv_tok = feat_rows.reshape(bs, nk, embed_dims)

    # ---- pos_embed (bs, C, num_views*h, w) -> tokens -----------------------
    pos_tok = pos_embed.transpose(0, 2, 3, 1).reshape(bs, nk, embed_dims)

    # ---- query embedding: batch-invariant, computed once for Nq rows -------
    ref = params["reference_points"]                              # (Nq, 3)
    qe = pos2posemb3d(ref, num_pos_feats=embed_dims // 2)         # (Nq, 3C/2)
    q_tok = query_embedding(qe, params["qe0_w"], params["qe0_b"],
                            params["qe1_w"], params["qe1_b"])     # (Nq, C)

    # ---- reference points output -------------------------------------------
    rp = jnp.broadcast_to(ref.reshape(1, hq, wq, 3), (bs, hq, wq, 3))
    rp = inverse_sigmoid(rp)

    # ---- transformer (Pallas flash cross-attention stub, 1 decoder layer) --
    dec_tok = cross_attention(q_tok, kv_tok, pos_tok,
                              params["attn_wq"], params["attn_wk"],
                              params["attn_wv"], params["attn_wo"],
                              kv_tile=kv_tile)                    # (bs, Nq, C)
    decoder_feats = [dec_tok]

    # ---- cls / reg branches (single fused Pallas kernel per decoder feat) --
    cls_list, reg_list = [], []
    for d in decoder_feats:
        rows = d.reshape(bs * nq, embed_dims)
        cls_rows, reg_rows = head_branches(rows, params,
                                           n_cls=num_cls_fcs, n_reg=num_reg_fcs)
        cls = cls_rows[:, :cls_out].reshape(bs, hq, wq, cls_out).transpose(0, 3, 1, 2)
        reg = reg_rows[:, :reg_out].reshape(bs, hq, wq, reg_out).transpose(0, 3, 1, 2)
        cls_list.append(cls)
        reg_list.append(reg)

    return (cls_list, reg_list), rp


# ----------------------------------------------------------------------------
if __name__ == "__main__":
    # small, self-consistent config (embed_dims multiple of 128 for lane density)
    bs, num_views = 2, 2
    in_channels, embed_dims = 256, 128
    h = w = 8
    num_query, query_align = 32, 8
    num_query_h = math.ceil(num_query / query_align)   # 4
    num_query_w = query_align                          # 8
    cls_out, reg_out = 10, 10
    num_cls_fcs = num_reg_fcs = 2

    key = jax.random.PRNGKey(0)
    kp, kf, ke = jax.random.split(key, 3)
    params = init_params(kp, in_channels=in_channels, embed_dims=embed_dims,
                         num_query=num_query_h * num_query_w,
                         cls_out=cls_out, reg_out=reg_out,
                         num_cls_fcs=num_cls_fcs, num_reg_fcs=num_reg_fcs)

    feat = jax.random.normal(kf, (bs * num_views, in_channels, h, w),
                             jnp.float32)
    # compile_model=True path: meta['pos_embed'] of shape (bs, C, num_views*h, w)
    pos_embed = jax.random.normal(ke, (bs, embed_dims, num_views * h, w),
                                  jnp.float32)

    (cls_list, reg_list), ref_pts = petr_head_forward(
        params, feat, pos_embed,
        num_views=num_views, embed_dims=embed_dims,
        num_query_h=num_query_h, num_query_w=num_query_w,
        num_cls_fcs=num_cls_fcs, num_reg_fcs=num_reg_fcs,
        cls_out=cls_out, reg_out=reg_out)

    jax.block_until_ready((cls_list, reg_list, ref_pts))
    assert cls_list[0].shape == (bs, cls_out, num_query_h, num_query_w)
    assert reg_list[0].shape == (bs, reg_out, num_query_h, num_query_w)
    assert ref_pts.shape == (bs, num_query_h, num_query_w, 3)
    assert bool(jnp.all(jnp.isfinite(cls_list[0])))
    assert bool(jnp.all(jnp.isfinite(reg_list[0])))
    print("KERNEL_OK")
</pallas_src>

<mosaic_0001>
module attributes {stable_mosaic.version = 11 : i64} {
  func.func @_conv1x1_kernel(%arg0: i32, %arg1: memref<256x256xf32, #tpu.memory_space<vmem>>, %arg2: memref<256x128xbf16, #tpu.memory_space<vmem>>, %arg3: memref<1x128xf32, #tpu.memory_space<vmem>>, %arg4: memref<256x128xf32, #tpu.memory_space<vmem>>) attributes {dimension_semantics = [#tpu.dimension_semantics<parallel>], iteration_bounds = array<i64: 1>, scalar_prefetch = 0 : i64, scratch_operands = 0 : i64, tpu.core_type = #tpu.core_type<tc>, window_params = [{transform_indices = @transform_0, window_bounds = array<i64: 256, 256>}, {pipeline_mode = #tpu.pipeline_mode<synchronous>, transform_indices = @transform_1, window_bounds = array<i64: 256, 128>}, {pipeline_mode = #tpu.pipeline_mode<synchronous>, transform_indices = @transform_2, window_bounds = array<i64: 1, 128>}, {transform_indices = @transform_3, window_bounds = array<i64: 256, 128>}]} {
    %c0 = arith.constant 0 : index
    %c0_0 = arith.constant 0 : index
    %0 = vector.load %arg1[%c0, %c0_0] : memref<256x256xf32, #tpu.memory_space<vmem>>, vector<256x256xf32>
    %1 = arith.truncf %0 : vector<256x256xf32> to vector<256x256xbf16>
    %c0_1 = arith.constant 0 : index
    %c0_2 = arith.constant 0 : index
    %2 = vector.load %arg2[%c0_1, %c0_2] : memref<256x128xbf16, #tpu.memory_space<vmem>>, vector<256x128xbf16>
    %cst = arith.constant dense<0.000000e+00> : vector<256x128xf32>
    %3 = tpu.matmul %1, %2, %cst {dimension_numbers = #tpu.dot_dimension_numbers<[1], [0], [0], [1], [0, 0, 1, 1], [], []>} : vector<256x256xbf16>, vector<256x128xbf16>, vector<256x128xf32> -> vector<256x128xf32>
    %c0_3 = arith.constant 0 : index
    %c0_4 = arith.constant 0 : index
    %4 = vector.load %arg3[%c0_3, %c0_4] : memref<1x128xf32, #tpu.memory_space<vmem>>, vector<1x128xf32>
    %5 = vector.broadcast %4 : vector<1x128xf32> to vector<256x128xf32>
    %6 = arith.addf %3, %5 : vector<256x128xf32>
    %c0_5 = arith.constant 0 : index
    %c0_6 = arith.constant 0 : index
    %7 = vector.load %arg4[%c0_5, %c0_6] : memref<256x128xf32, #tpu.memory_space<vmem>>, vector<256x128xf32>
    tpu.vector_store %arg4[%c0_5, %c0_6], %6 {strides = array<i32>} : memref<256x128xf32, #tpu.memory_space<vmem>>, vector<256x128xf32>,
    return
  }
  func.func @transform_0(%arg0: i32) -> (i32, i32) {
    %c0_i32 = arith.constant 0 : i32
    %c0_i32_0 = arith.constant 0 : i32
    return %arg0, %c0_i32 : i32, i32
  }
  func.func @transform_1(%arg0: i32) -> (i32, i32) {
    %c0_i32 = arith.constant 0 : i32
    %c0_i32_0 = arith.constant 0 : i32
    %c0_i32_1 = arith.constant 0 : i32
    return %c0_i32, %c0_i32_0 : i32, i32
  }
  func.func @transform_2(%arg0: i32) -> (i32, i32) {
    %c0_i32 = arith.constant 0 : i32
    %c0_i32_0 = arith.constant 0 : i32
    %c0_i32_1 = arith.constant 0 : i32
    return %c0_i32, %c0_i32_0 : i32, i32
  }
  func.func @transform_3(%arg0: i32) -> (i32, i32) {
    %c0_i32 = arith.constant 0 : i32
    %c0_i32_0 = arith.constant 0 : i32
    return %arg0, %c0_i32 : i32, i32
  }
}

</mosaic_0001>

<llo_original>
// kernel: tpu_custom_call.1
$region0: #{tpu_custom_call.1}
  #allocation0 [shape = 'u32[]', space=smem, size = 0x4, offset = 0x4, fixed_abs, tag = 'smem constant byte address 0x4 - core index']
  #allocation1 [shape = 'u32[72,128]{1,0:T(1,128)}', space=vmem, size = 0x9000, scoped, tag = 'internal scratch']
  %s0 = inlined_call_operand.hbm [shape: f32[256,256], index: 0, kind: input, shape index: {}]
  %s1 = inlined_call_operand.hbm [shape: bf16[256,128], index: 1, kind: input, shape index: {}]
  %s2 = inlined_call_operand.vmem [shape: f32[1,128], index: 2, kind: input, shape index: {}]
  %s3 = inlined_call_operand.hbm [shape: f32[256,128], index: 3, kind: output, shape index: {}]
  %s4 = sld [smem:[#allocation0]]
  $region30: #{tpu_custom_call.1} parent=0
    _
  %s6 = ssub.s32 1, %s4
  %s7 = scalar_select 0, %s6, %s4
  $region1: #{tpu_custom_call.1} parent=0
    #allocation2 [shape = 'u8[262144]{0}', space=vmem, size = 0x40000, scoped, tag = 'input window, operand 0, single buffered']
    #allocation3 [shape = 's32[1]{0}', space=sflag, size = 0x4, scoped, tag = 'scoped memory for tpu_custom_call.1']
    #allocation4 [shape = 's32[1]{0}', space=sflag, size = 0x4, scoped, tag = 'scoped memory for tpu_custom_call.1']
    #allocation5 [shape = 'u8[65536]{0}', space=vmem, size = 0x10000, scoped, tag = 'input window, operand 1, single buffered']
    #allocation6 [shape = 's32[1]{0}', space=sflag, size = 0x4, scoped, tag = 'scoped memory for tpu_custom_call.1']
    #allocation7 [shape = 'u8[131072]{0}', space=vmem, size = 0x20000, scoped, tag = 'output window, operand 0, single buffered']
    %8 = vsyncpa [#allocation3], 0
    %9 = vsyncpa [#allocation6], 0
    %10 = vsyncpa [#allocation4], 0
    // Predicated region
    $region2: #{tpu_custom_call.1} parent=1 // pred_check
      _
    $region3: #{tpu_custom_call.1} parent=1 // pred_check_branch
      %12 = sbr.rel (0) target = $region5
    $region4: #{tpu_custom_call.1} parent=1 // pred_region
      %14 = vsyncadd [#allocation3], 0
      %s15 = sshll.u32 %s0, 4
      %s16 = int_to_ptr.hbm [resolvable:$true] %s15
      %s17 = sshll.u32 [#allocation2], 4
      %s18 = int_to_ptr.vmem [resolvable:$true] %s17
      %23 = dma.hbm_to_vmem [thread:$0]  %s16, 8192, %s18, [#allocation3], 256, 256, 16
    $region5: #{tpu_custom_call.1} parent=1 // pred_fallthru
      _
    // Predicated region
    $region6: #{tpu_custom_call.1} parent=1 // pred_check
      _
    $region7: #{tpu_custom_call.1} parent=1 // pred_check_branch
      %25 = sbr.rel (0) target = $region9
    $region8: #{tpu_custom_call.1} parent=1 // pred_region
      %27 = vsyncadd [#allocation6], 0
      %s28 = sshll.u32 %s1, 4
      %s29 = int_to_ptr.hbm [resolvable:$true] %s28
      %s30 = sshll.u32 [#allocation5], 4
      %s31 = int_to_ptr.vmem [resolvable:$true] %s30
      %36 = dma.hbm_to_vmem [thread:$0]  %s29, 2048, %s31, [#allocation6], 64, 64, 4
    $region9: #{tpu_custom_call.1} parent=1 // pred_fallthru
      _
    // Predicated region
    $region10: #{tpu_custom_call.1} parent=1 // pred_check
      _
    $region11: #{tpu_custom_call.1} parent=1 // pred_check_branch
      %38 = sbr.rel (0) target = $region13
    $region12: #{tpu_custom_call.1} parent=1 // pred_region
      _
    $region13: #{tpu_custom_call.1} parent=1 // pred_fallthru
      _
    // Predicated region
    $region14: #{tpu_custom_call.1} parent=1 // pred_check
      _
    $region15: #{tpu_custom_call.1} parent=1 // pred_check_branch
      %40 = sbr.rel (0) target = $region17
    $region16: #{tpu_custom_call.1} parent=1 // pred_region
      %42 = dma.done [#allocation3], 8192
    $region17: #{tpu_custom_call.1} parent=1 // pred_fallthru
      _
    // Predicated region
    $region18: #{tpu_custom_call.1} parent=1 // pred_check
      _
    $region19: #{tpu_custom_call.1} parent=1 // pred_check_branch
      %44 = sbr.rel (0) target = $region21
    $region20: #{tpu_custom_call.1} parent=1 // pred_region
      %46 = dma.done [#allocation6], 2048
    $region21: #{tpu_custom_call.1} parent=1 // pred_fallthru
      _
    %v47 = vld [vmem:[#allocation2] sm:$0xff]
    %v48 = vld [vmem:[#allocation2 + $0x8] sm:$0xff]
    %v49 = vld [vmem:[#allocation2 + $0x10] sm:$0xff]
    %v50 = vld [vmem:[#allocation2 + $0x18] sm:$0xff]
    %v51 = vld [vmem:[#allocation2 + $0x20] sm:$0xff]
    %v52 = vld [vmem:[#allocation2 + $0x28] sm:$0xff]
    %v53 = vld [vmem:[#allocation2 + $0x30] sm:$0xff]
    %v54 = vld [vmem:[#allocation2 + $0x38] sm:$0xff]
    %v55 = vld [vmem:[#allocation2 + $0x40] sm:$0xff]
    %v56 = vld [vmem:[#allocation2 + $0x48] sm:$0xff]
    %v57 = vld [vmem:[#allocation2 + $0x50] sm:$0xff]
    %v58 = vld [vmem:[#allocation2 + $0x58] sm:$0xff]
    %v59 = vld [vmem:[#allocation2 + $0x60] sm:$0xff]
    %v60 = vld [vmem:[#allocation2 + $0x68] sm:$0xff]
    %v61 = vld [vmem:[#allocation2 + $0x70] sm:$0xff]
    %v62 = vld [vmem:[#allocation2 + $0x78] sm:$0xff]
    %v63 = vld [vmem:[#allocation2 + $0x80] sm:$0xff]
    %v64 = vld [vmem:[#allocation2 + $0x88] sm:$0xff]
    %v65 = vld [vmem:[#allocation2 + $0x90] sm:$0xff]
    %v66 = vld [vmem:[#allocation2 + $0x98] sm:$0xff]
    %v67 = vld [vmem:[#allocation2 + $0xa0] sm:$0xff]
    %v68 = vld [vmem:[#allocation2 + $0xa8] sm:$0xff]
    %v69 = vld [vmem:[#allocation2 + $0xb0] sm:$0xff]
    %v70 = vld [vmem:[#allocation2 + $0xb8] sm:$0xff]
    %v71 = vld [vmem:[#allocation2 + $0xc0] sm:$0xff]
    %v72 = vld [vmem:[#allocation2 + $0xc8] sm:$0xff]
    %v73 = vld [vmem:[#allocation2 + $0xd0] sm:$0xff]
    %v74 = vld [vmem:[#allocation2 + $0xd8] sm:$0xff]
    %v75 = vld [vmem:[#allocation2 + $0xe0] sm:$0xff]
    %v76 = vld [vmem:[#allocation2 + $0xe8] sm:$0xff]
    %v77 = vld [vmem:[#allocation2 + $0xf0] sm:$0xff]
    %v78 = vld [vmem:[#allocation2 + $0xf8] sm:$0xff]
    %v79 = vld [vmem:[#allocation2 + $0x100] sm:$0xff]
    %v80 = vld [vmem:[#allocation2 + $0x108] sm:$0xff]
    %v81 = vld [vmem:[#allocation2 + $0x110] sm:$0xff]
    %v82 = vld [vmem:[#allocation2 + $0x118] sm:$0xff]
    %v83 = vld [vmem:[#allocation2 + $0x120] sm:$0xff]
    %v84 = vld [vmem:[#allocation2 + $0x128] sm:$0xff]
    %v85 = vld [vmem:[#allocation2 + $0x130] sm:$0xff]
    %v86 = vld [vmem:[#allocation2 + $0x138] sm:$0xff]
    %v87 = vld [vmem:[#allocation2 + $0x140] sm:$0xff]
    %v88 = vld [vmem:[#allocation2 + $0x148] sm:$0xff]
    %v89 = vld [vmem:[#allocation2 + $0x150] sm:$0xff]
    %v90 = vld [vmem:[#allocation2 + $0x158] sm:$0xff]
    %v91 = vld [vmem:[#allocation2 + $0x160] sm:$0xff]
    %v92 = vld [vmem:[#allocation2 + $0x168] sm:$0xff]
    %v93 = vld [vmem:[#allocation2 + $0x170] sm:$0xff]
    %v94 = vld [vmem:[#allocation2 + $0x178] sm:$0xff]
    %v95 = vld [vmem:[#allocation2 + $0x180] sm:$0xff]
    %v96 = vld [vmem:[#allocation2 + $0x188] sm:$0xff]
    %v97 = vld [vmem:[#allocation2 + $0x190] sm:$0xff]
    %v98 = vld [vmem:[#allocation2 + $0x198] sm:$0xff]
    %v99 = vld [vmem:[#allocation2 + $0x1a0] sm:$0xff]
    %v100 = vld [vmem:[#allocation2 + $0x1a8] sm:$0xff]
    %v101 = vld [vmem:[#allocation2 + $0x1b0] sm:$0xff]
    %v102 = vld [vmem:[#allocation2 + $0x1b8] sm:$0xff]
    %v103 = vld [vmem:[#allocation2 + $0x1c0] sm:$0xff]
    %v104 = vld [vmem:[#allocation2 + $0x1c8] sm:$0xff]
    %v105 = vld [vmem:[#allocation2 + $0x1d0] sm:$0xff]
    %v106 = vld [vmem:[#allocation2 + $0x1d8] sm:$0xff]
    %v107 = vld [vmem:[#allocation2 + $0x1e0] sm:$0xff]
    %v108 = vld [vmem:[#allocation2 + $0x1e8] sm:$0xff]
    %v109 = vld [vmem:[#allocation2 + $0x1f0] sm:$0xff]
    %v110 = vld [vmem:[#allocation2 + $0x1f8] sm:$0xff]
    %v111 = vpack.c.bf16 %v49, %v47
    %v112 = vpack.c.bf16 %v50, %v48
    %v113 = vpack.c.bf16 %v53, %v51
    %v114 = vpack.c.bf16 %v54, %v52
    %v115 = vpack.c.bf16 %v57, %v55
    %v116 = vpack.c.bf16 %v58, %v56
    %v117 = vpack.c.bf16 %v61, %v59
    %v118 = vpack.c.bf16 %v62, %v60
    %v119 = vpack.c.bf16 %v65, %v63
    %v120 = vpack.c.bf16 %v66, %v64
    %v121 = vpack.c.bf16 %v69, %v67
    %v122 = vpack.c.bf16 %v70, %v68
    %v123 = vpack.c.bf16 %v73, %v71
    %v124 = vpack.c.bf16 %v74, %v72
    %v125 = vpack.c.bf16 %v77, %v75
    %v126 = vpack.c.bf16 %v78, %v76
    %v127 = vpack.c.bf16 %v81, %v79
    %v128 = vpack.c.bf16 %v82, %v80
    %v129 = vpack.c.bf16 %v85, %v83
    %v130 = vpack.c.bf16 %v86, %v84
    %v131 = vpack.c.bf16 %v89, %v87
    %v132 = vpack.c.bf16 %v90, %v88
    %v133 = vpack.c.bf16 %v93, %v91
    %v134 = vpack.c.bf16 %v94, %v92
    %v135 = vpack.c.bf16 %v97, %v95
    %v136 = vpack.c.bf16 %v98, %v96
    %v137 = vpack.c.bf16 %v101, %v99
    %v138 = vpack.c.bf16 %v102, %v100
    %v139 = vpack.c.bf16 %v105, %v103
    %v140 = vpack.c.bf16 %v106, %v104
    %v141 = vpack.c.bf16 %v109, %v107
    %v142 = vpack.c.bf16 %v110, %v108
    %v143 = vld [vmem:[#allocation5] sm:$0xf]
    %v144 = vld [vmem:[#allocation5 + $0x4] sm:$0xf]
    %v145 = vld [vmem:[#allocation5 + $0x8] sm:$0xf]
    %v146 = vld [vmem:[#allocation5 + $0xc] sm:$0xf]
    %v147 = vld [vmem:[#allocation5 + $0x10] sm:$0xf]
    %v148 = vld [vmem:[#allocation5 + $0x14] sm:$0xf]
    %v149 = vld [vmem:[#allocation5 + $0x18] sm:$0xf]
    %v150 = vld [vmem:[#allocation5 + $0x1c] sm:$0xf]
    %v151 = vld [vmem:[#allocation5 + $0x20] sm:$0xf]
    %v152 = vld [vmem:[#allocation5 + $0x24] sm:$0xf]
    %v153 = vld [vmem:[#allocation5 + $0x28] sm:$0xf]
    %v154 = vld [vmem:[#allocation5 + $0x2c] sm:$0xf]
    %v155 = vld [vmem:[#allocation5 + $0x30] sm:$0xf]
    %v156 = vld [vmem:[#allocation5 + $0x34] sm:$0xf]
    %v157 = vld [vmem:[#allocation5 + $0x38] sm:$0xf]
    %v158 = vld [vmem:[#allocation5 + $0x3c] sm:$0xf]
    %v159 = vld [vmem:[#allocation5 + $0x40] sm:$0xf]
    %v160 = vld [vmem:[#allocation5 + $0x44] sm:$0xf]
    %v161 = vld [vmem:[#allocation5 + $0x48] sm:$0xf]
    %v162 = vld [vmem:[#allocation5 + $0x4c] sm:$0xf]
    %v163 = vld [vmem:[#allocation5 + $0x50] sm:$0xf]
    %v164 = vld [vmem:[#allocation5 + $0x54] sm:$0xf]
    %v165 = vld [vmem:[#allocation5 + $0x58] sm:$0xf]
    %v166 = vld [vmem:[#allocation5 + $0x5c] sm:$0xf]
    %v167 = vld [vmem:[#allocation5 + $0x60] sm:$0xf]
    %v168 = vld [vmem:[#allocation5 + $0x64] sm:$0xf]
    %v169 = vld [vmem:[#allocation5 + $0x68] sm:$0xf]
    %v170 = vld [vmem:[#allocation5 + $0x6c] sm:$0xf]
    %v171 = vld [vmem:[#allocation5 + $0x70] sm:$0xf]
    %v172 = vld [vmem:[#allocation5 + $0x74] sm:$0xf]
    %v173 = vld [vmem:[#allocation5 + $0x78] sm:$0xf]
    %v174 = vld [vmem:[#allocation5 + $0x7c] sm:$0xf]
    %v175 = vld [vmem:[%s2] sm:$0x1]
    %v177 = vperm.slane %v175, 0
    %v211 = vunpack.c.l.b16 %v143
    %v212 = vunpack.c.l.b16 %v144
    %v213 = vunpack.c.l.b16 %v145
    %v214 = vunpack.c.l.b16 %v146
    %v215 = vunpack.c.l.b16 %v147
    %v216 = vunpack.c.l.b16 %v148
    %v217 = vunpack.c.l.b16 %v149
    %v218 = vunpack.c.l.b16 %v150
    %v219 = vunpack.c.l.b16 %v151
    %v220 = vunpack.c.l.b16 %v152
    %v221 = vunpack.c.l.b16 %v153
    %v222 = vunpack.c.l.b16 %v154
    %v223 = vunpack.c.l.b16 %v155
    %v224 = vunpack.c.l.b16 %v156
    %v225 = vunpack.c.l.b16 %v157
    %v226 = vunpack.c.l.b16 %v158
    %v227 = vunpack.c.l.b16 %v159
    %v228 = vunpack.c.l.b16 %v160
    %v229 = vunpack.c.l.b16 %v161
    %v230 = vunpack.c.l.b16 %v162
    %v231 = vunpack.c.l.b16 %v163
    %v232 = vunpack.c.l.b16 %v164
    %v233 = vunpack.c.l.b16 %v165
    %v234 = vunpack.c.l.b16 %v166
    %v235 = vunpack.c.l.b16 %v167
    %v236 = vunpack.c.l.b16 %v168
    %v237 = vunpack.c.l.b16 %v169
    %v238 = vunpack.c.l.b16 %v170
    %v239 = vunpack.c.l.b16 %v171
    %v240 = vunpack.c.l.b16 %v172
    %v241 = vunpack.c.l.b16 %v173
    %v242 = vunpack.c.l.b16 %v174
    %v243 = vpack.c.b16 %v212, %v211
    %v244 = vpack.c.b16 %v214, %v213
    %v245 = vpack.c.b16 %v216, %v215
    %v246 = vpack.c.b16 %v218, %v217
    %v247 = vpack.c.b16 %v220, %v219
    %v248 = vpack.c.b16 %v222, %v221
    %v249 = vpack.c.b16 %v224, %v223
    %v250 = vpack.c.b16 %v226, %v225
    %v251 = vpack.c.b16 %v228, %v227
    %v252 = vpack.c.b16 %v230, %v229
    %v253 = vpack.c.b16 %v232, %v231
    %v254 = vpack.c.b16 %v234, %v233
    %v255 = vpack.c.b16 %v236, %v235
    %v256 = vpack.c.b16 %v238, %v237
    %v257 = vpack.c.b16 %v240, %v239
    %v258 = vpack.c.b16 %v242, %v241
    %275 = vmatpush.bf16.msra.mxu0 %v250
    %276 = vmatpush.bf16.msra.mxu0 %v249
    %277 = vmatpush.bf16.msra.mxu0 %v248
    %278 = vmatpush.bf16.msra.mxu0 %v247
    %279 = vmatpush.bf16.msra.mxu0 %v246
    %280 = vmatpush.bf16.msra.mxu0 %v245
    %281 = vmatpush.bf16.msra.mxu0 %v244
    %282 = vmatpush.bf16.msra.mxu0 %v243
    %283 = vmatmul.bf16.gmra.mxu0 %v111
    %v284 = vpop.f32.mrf.mxu0
    %v285 = vadd.f32 %v177, %v284
    %v286 = vpop.f32.mrf.mxu0
    %v287 = vadd.f32 %v177, %v286
    %288 = vmatmul.bf16.gmra.mxu0 %v113
    %v289 = vpop.f32.mrf.mxu0
    %v290 = vadd.f32 %v177, %v289
    %v291 = vpop.f32.mrf.mxu0
    %v292 = vadd.f32 %v177, %v291
    %293 = vmatmul.bf16.gmra.mxu0 %v115
    %v294 = vpop.f32.mrf.mxu0
    %v295 = vadd.f32 %v177, %v294
    %v296 = vpop.f32.mrf.mxu0
    %v297 = vadd.f32 %v177, %v296
    %298 = vmatmul.bf16.gmra.mxu0 %v117
    %v299 = vpop.f32.mrf.mxu0
    %v300 = vadd.f32 %v177, %v299
    %v301 = vpop.f32.mrf.mxu0
    %v302 = vadd.f32 %v177, %v301
    %303 = vmatmul.bf16.gmra.mxu0 %v119
    %v304 = vpop.f32.mrf.mxu0
    %v305 = vadd.f32 %v177, %v304
    %v306 = vpop.f32.mrf.mxu0
    %v307 = vadd.f32 %v177, %v306
    %308 = vmatmul.bf16.gmra.mxu0 %v121
    %v309 = vpop.f32.mrf.mxu0
    %v310 = vadd.f32 %v177, %v309
    %v311 = vpop.f32.mrf.mxu0
    %v312 = vadd.f32 %v177, %v311
    %313 = vmatmul.bf16.gmra.mxu0 %v123
    %v314 = vpop.f32.mrf.mxu0
    %v315 = vadd.f32 %v177, %v314
    %v316 = vpop.f32.mrf.mxu0
    %v317 = vadd.f32 %v177, %v316
    %318 = vmatmul.bf16.gmra.mxu0 %v125
    %v319 = vpop.f32.mrf.mxu0
    %v320 = vadd.f32 %v177, %v319
    %v321 = vpop.f32.mrf.mxu0
    %v322 = vadd.f32 %v177, %v321
    %323 = vmatmul.bf16.gmra.mxu0 %v127
    %v324 = vpop.f32.mrf.mxu0
    %v325 = vadd.f32 %v177, %v324
    %v326 = vpop.f32.mrf.mxu0
    %v327 = vadd.f32 %v177, %v326
    %328 = vmatmul.bf16.gmra.mxu0 %v129
    %v329 = vpop.f32.mrf.mxu0
    %v330 = vadd.f32 %v177, %v329
    %v331 = vpop.f32.mrf.mxu0
    %v332 = vadd.f32 %v177, %v331
    %333 = vmatmul.bf16.gmra.mxu0 %v131
    %v334 = vpop.f32.mrf.mxu0
    %v335 = vadd.f32 %v177, %v334
    %v336 = vpop.f32.mrf.mxu0
    %v337 = vadd.f32 %v177, %v336
    %338 = vmatmul.bf16.gmra.mxu0 %v133
    %v339 = vpop.f32.mrf.mxu0
    %v340 = vadd.f32 %v177, %v339
    %v341 = vpop.f32.mrf.mxu0
    %v342 = vadd.f32 %v177, %v341
    %343 = vmatmul.bf16.gmra.mxu0 %v135
    %v344 = vpop.f32.mrf.mxu0
    %v345 = vadd.f32 %v177, %v344
    %v346 = vpop.f32.mrf.mxu0
    %v347 = vadd.f32 %v177, %v346
    %348 = vmatmul.bf16.gmra.mxu0 %v137
    %v349 = vpop.f32.mrf.mxu0
    %v350 = vadd.f32 %v177, %v349
    %v351 = vpop.f32.mrf.mxu0
    %v352 = vadd.f32 %v177, %v351
    %353 = vmatmul.bf16.gmra.mxu0 %v139
    %v354 = vpop.f32.mrf.mxu0
    %v355 = vadd.f32 %v177, %v354
    %v356 = vpop.f32.mrf.mxu0
    %v357 = vadd.f32 %v177, %v356
    %358 = vmatmul.bf16.gmra.mxu0 %v141
    %v359 = vpop.f32.mrf.mxu0
    %v360 = vadd.f32 %v177, %v359
    %v361 = vpop.f32.mrf.mxu0
    %v362 = vadd.f32 %v177, %v361
    %363 = vdwg.mxu0
    %364 = vmatpush.bf16.msra.mxu0 %v258
    %365 = vmatpush.bf16.msra.mxu0 %v257
    %366 = vmatpush.bf16.msra.mxu0 %v256
    %367 = vmatpush.bf16.msra.mxu0 %v255
    %368 = vmatpush.bf16.msra.mxu0 %v254
    %369 = vmatpush.bf16.msra.mxu0 %v253
    %370 = vmatpush.bf16.msra.mxu0 %v252
    %371 = vmatpush.bf16.msra.mxu0 %v251
    %372 = vmatmul.bf16.gmra.mxu0 %v112
    %v373 = vpop.f32.mrf.mxu0
    %v374 = vadd.f32 %v285, %v373
    %v375 = vpop.f32.mrf.mxu0
    %v376 = vadd.f32 %v287, %v375
    %377 = vmatmul.bf16.gmra.mxu0 %v114
    %v378 = vpop.f32.mrf.mxu0
    %v379 = vadd.f32 %v290, %v378
    %v380 = vpop.f32.mrf.mxu0
    %v381 = vadd.f32 %v292, %v380
    %382 = vmatmul.bf16.gmra.mxu0 %v116
    %v383 = vpop.f32.mrf.mxu0
    %v384 = vadd.f32 %v295, %v383
    %v385 = vpop.f32.mrf.mxu0
    %v386 = vadd.f32 %v297, %v385
    %387 = vmatmul.bf16.gmra.mxu0 %v118
    %v388 = vpop.f32.mrf.mxu0
    %v389 = vadd.f32 %v300, %v388
    %v390 = vpop.f32.mrf.mxu0
    %v391 = vadd.f32 %v302, %v390
    %392 = vmatmul.bf16.gmra.mxu0 %v120
    %v393 = vpop.f32.mrf.mxu0
    %v394 = vadd.f32 %v305, %v393
    %v395 = vpop.f32.mrf.mxu0
    %v396 = vadd.f32 %v307, %v395
    %397 = vmatmul.bf16.gmra.mxu0 %v122
    %v398 = vpop.f32.mrf.mxu0
    %v399 = vadd.f32 %v310, %v398
    %v400 = vpop.f32.mrf.mxu0
    %v401 = vadd.f32 %v312, %v400
    %402 = vmatmul.bf16.gmra.mxu0 %v124
    %v403 = vpop.f32.mrf.mxu0
    %v404 = vadd.f32 %v315, %v403
    %v405 = vpop.f32.mrf.mxu0
    %v406 = vadd.f32 %v317, %v405
    %407 = vmatmul.bf16.gmra.mxu0 %v126
    %v408 = vpop.f32.mrf.mxu0
    %v409 = vadd.f32 %v320, %v408
    %v410 = vpop.f32.mrf.mxu0
    %v411 = vadd.f32 %v322, %v410
    %412 = vmatmul.bf16.gmra.mxu0 %v128
    %v413 = vpop.f32.mrf.mxu0
    %v414 = vadd.f32 %v325, %v413
    %v415 = vpop.f32.mrf.mxu0
    %v416 = vadd.f32 %v327, %v415
    %417 = vmatmul.bf16.gmra.mxu0 %v130
    %v418 = vpop.f32.mrf.mxu0
    %v419 = vadd.f32 %v330, %v418
    %v420 = vpop.f32.mrf.mxu0
    %v421 = vadd.f32 %v332, %v420
    %422 = vmatmul.bf16.gmra.mxu0 %v132
    %v423 = vpop.f32.mrf.mxu0
    %v424 = vadd.f32 %v335, %v423
    %v425 = vpop.f32.mrf.mxu0
    %v426 = vadd.f32 %v337, %v425
    %427 = vmatmul.bf16.gmra.mxu0 %v134
    %v428 = vpop.f32.mrf.mxu0
    %v429 = vadd.f32 %v340, %v428
    %v430 = vpop.f32.mrf.mxu0
    %v431 = vadd.f32 %v342, %v430
    %432 = vmatmul.bf16.gmra.mxu0 %v136
    %v433 = vpop.f32.mrf.mxu0
    %v434 = vadd.f32 %v345, %v433
    %v435 = vpop.f32.mrf.mxu0
    %v436 = vadd.f32 %v347, %v435
    %437 = vmatmul.bf16.gmra.mxu0 %v138
    %v438 = vpop.f32.mrf.mxu0
    %v439 = vadd.f32 %v350, %v438
    %v440 = vpop.f32.mrf.mxu0
    %v441 = vadd.f32 %v352, %v440
    %442 = vmatmul.bf16.gmra.mxu0 %v140
    %v443 = vpop.f32.mrf.mxu0
    %v444 = vadd.f32 %v355, %v443
    %v445 = vpop.f32.mrf.mxu0
    %v446 = vadd.f32 %v357, %v445
    %447 = vmatmul.bf16.gmra.mxu0 %v142
    %v448 = vpop.f32.mrf.mxu0
    %v449 = vadd.f32 %v360, %v448
    %v450 = vpop.f32.mrf.mxu0
    %v451 = vadd.f32 %v362, %v450
    %452 = vdwg.mxu0
    %453 = vst [vmem:[#allocation7] sm:$0xff] %v374
    %454 = vst [vmem:[#allocation7 + $0x8] sm:$0xff] %v376
    %455 = vst [vmem:[#allocation7 + $0x10] sm:$0xff] %v379
    %456 = vst [vmem:[#allocation7 + $0x18] sm:$0xff] %v381
    %457 = vst [vmem:[#allocation7 + $0x20] sm:$0xff] %v384
    %458 = vst [vmem:[#allocation7 + $0x28] sm:$0xff] %v386
    %459 = vst [vmem:[#allocation7 + $0x30] sm:$0xff] %v389
    %460 = vst [vmem:[#allocation7 + $0x38] sm:$0xff] %v391
    %461 = vst [vmem:[#allocation7 + $0x40] sm:$0xff] %v394
    %462 = vst [vmem:[#allocation7 + $0x48] sm:$0xff] %v396
    %463 = vst [vmem:[#allocation7 + $0x50] sm:$0xff] %v399
    %464 = vst [vmem:[#allocation7 + $0x58] sm:$0xff] %v401
    %465 = vst [vmem:[#allocation7 + $0x60] sm:$0xff] %v404
    %466 = vst [vmem:[#allocation7 + $0x68] sm:$0xff] %v406
    %467 = vst [vmem:[#allocation7 + $0x70] sm:$0xff] %v409
    %468 = vst [vmem:[#allocation7 + $0x78] sm:$0xff] %v411
    %469 = vst [vmem:[#allocation7 + $0x80] sm:$0xff] %v414
    %470 = vst [vmem:[#allocation7 + $0x88] sm:$0xff] %v416
    %471 = vst [vmem:[#allocation7 + $0x90] sm:$0xff] %v419
    %472 = vst [vmem:[#allocation7 + $0x98] sm:$0xff] %v421
    %473 = vst [vmem:[#allocation7 + $0xa0] sm:$0xff] %v424
    %474 = vst [vmem:[#allocation7 + $0xa8] sm:$0xff] %v426
    %475 = vst [vmem:[#allocation7 + $0xb0] sm:$0xff] %v429
    %476 = vst [vmem:[#allocation7 + $0xb8] sm:$0xff] %v431
    %477 = vst [vmem:[#allocation7 + $0xc0] sm:$0xff] %v434
    %478 = vst [vmem:[#allocation7 + $0xc8] sm:$0xff] %v436
    %479 = vst [vmem:[#allocation7 + $0xd0] sm:$0xff] %v439
    %480 = vst [vmem:[#allocation7 + $0xd8] sm:$0xff] %v441
    %481 = vst [vmem:[#allocation7 + $0xe0] sm:$0xff] %v444
    %482 = vst [vmem:[#allocation7 + $0xe8] sm:$0xff] %v446
    %483 = vst [vmem:[#allocation7 + $0xf0] sm:$0xff] %v449
    %484 = vst [vmem:[#allocation7 + $0xf8] sm:$0xff] %v451
    // Predicated region
    $region22: #{tpu_custom_call.1} parent=1 // pred_check
      _
    $region23: #{tpu_custom_call.1} parent=1 // pred_check_branch
      %486 = sbr.rel (0) target = $region25
    $region24: #{tpu_custom_call.1} parent=1 // pred_region
      %488 = vsyncadd [#allocation4], 0
      %s489 = sshll.u32 [#allocation7], 4
      %s490 = int_to_ptr.vmem [resolvable:$true] %s489
      %s491 = sshll.u32 %s3, 4
      %s492 = int_to_ptr.hbm [resolvable:$true] %s491
      %497 = dma.vmem_to_hbm [thread:$0]  %s490, 4096, %s492, [#allocation4], 128, 128, 8
    $region25: #{tpu_custom_call.1} parent=1 // pred_fallthru
      _
    // Predicated region
    $region26: #{tpu_custom_call.1} parent=1 // pred_check
      _
    $region27: #{tpu_custom_call.1} parent=1 // pred_check_branch
      %499 = sbr.rel (0) target = $region29
    $region28: #{tpu_custom_call.1} parent=1 // pred_region
      %501 = dma.done [#allocation4], 4096
    $region29: #{tpu_custom_call.1} parent=1 // pred_fallthru
      _
    %502 = vsyncpa [#allocation3], 1
    %503 = vsyncpa [#allocation6], 1
    %504 = vsyncpa [#allocation4], 1

</llo_original>
